<compile_context>
chip_gen: v7x
topology: tpu7x:2x2x1
jax: 0.10.0
libtpu: 0.0.40
codegen_flags: <defaults>
</compile_context>

<pallas_src>
import functools

import jax
import jax.numpy as jnp
from jax.experimental import pallas as pl
from jax.experimental.pallas import tpu as pltpu


def _round_up(v, m):
    return ((v + m - 1) // m) * m


def _autoenc_kernel(*refs, hidden_layers, is_train, hidden_matmul):
    """Full autoencoder forward for one lane-dense batch tile.

    x_ref   : [1, 1, B]   B samples along lanes
    eps_ref : [1, 1, B]   U(-0.5, 0.5) noise (only present when is_train=True)
    *w_in   : [H, 1]      first linear weight (torch layout [out, in]), f32
    *b_in   : [H, 1]      first linear bias, f32
    *w_h    : [L, H, H]   stacked hidden weights (bf16 in "mxu_bf16" mode, else f32)
    *b_h    : [L, H, 1]   stacked hidden biases, f32        -- only if L > 0
    *w_out  : [H, 1]      last linear weight (transposed), f32
    *b_out  : [1, 1]      last linear bias, f32
    out_ref : [1, 1, B]   output tile
    """
    refs = list(refs)
    x_ref = refs.pop(0)
    eps_ref = refs.pop(0) if is_train else None
    if hidden_layers > 0:
        (ew_in, eb_in, ew_h, eb_h, ew_out, eb_out,
         dw_in, db_in, dw_h, db_h, dw_out, db_out, out_ref) = refs
    else:
        (ew_in, eb_in, ew_out, eb_out,
         dw_in, db_in, dw_out, db_out, out_ref) = refs
        ew_h = eb_h = dw_h = db_h = None

    def hidden_layer(w, b, h):
        # w: [H, H] (torch layout [out, in]); b: [H, 1] f32; h: [H, B] f32
        if hidden_matmul == "vpu_f32":
            # H unrolled broadcast-FMAs on the VPU; keeps the (under-utilised at
            # small H) MXU idle. Exact f32 math.
            acc = b
            for k in range(w.shape[1]):
                acc = acc + w[:, k:k + 1] * h[k:k + 1, :]
            return jnp.maximum(acc, 0.0)
        # MXU path: bf16 operands in "mxu_bf16" mode, f32 accumulation either way.
        rhs = h.astype(w.dtype) if w.dtype != h.dtype else h
        z = jnp.dot(w, rhs, preferred_element_type=jnp.float32)
        return jnp.maximum(z + b, 0.0)

    def mlp(v, w_in, b_in, w_h, b_h, w_out, b_out):
        # Linear(1, H) as a VPU broadcast FMA: [H,1] * [1,B] + [H,1] -> [H,B]
        h = jnp.maximum(w_in[...] * v + b_in[...], 0.0)
        # Hidden Linear(H, H) layers (static unroll; see TODO above for large L).
        for i in range(hidden_layers):
            h = hidden_layer(w_h[i], b_h[i], h)
        # Linear(H, 1) as VPU multiply + sublane (XLU) reduce over H -> [1,B]
        return jnp.sum(w_out[...] * h, axis=0, keepdims=True) + b_out[...]

    x = x_ref[0].astype(jnp.float32)                       # [1, B]

    # --- encoder ---
    y = mlp(x, ew_in, eb_in, ew_h, eb_h, ew_out, eb_out)

    # --- round / noise ---
    if is_train:
        yhat = y + eps_ref[0].astype(jnp.float32)
    else:
        yhat = jnp.round(y)            # round-half-to-even, same as torch.round

    # --- decoder ---
    xhat = mlp(yhat, dw_in, db_in, dw_h, db_h, dw_out, db_out)

    out_ref[0] = xhat.astype(out_ref.dtype)


def autoencoder_forward(x, eps, params, *, hidden_layers, is_train=True,
                        block_batch=2048, hidden_matmul="auto"):
    """x: [N,1] (or [N]) f32; eps: same (ignored when is_train=False).

    hidden_matmul: "auto" | "mxu_bf16" | "mxu_f32" | "vpu_f32".
    Returns xhat: [N,1] f32.
    """
    if hidden_matmul == "auto":
        hidden_matmul = "mxu_bf16"
    assert hidden_matmul in ("mxu_bf16", "mxu_f32", "vpu_f32")
    assert block_batch % 128 == 0, "block_batch must be a multiple of 128 (lane width)"
    if is_train:
        assert eps is not None

    x = jnp.asarray(x, jnp.float32).reshape(-1)
    n = x.shape[0]
    # Clamp the lane tile: (a) small N is not padded to a whole block_batch,
    # (b) at least 2 grid tiles exist when N allows it (v7x has 2 TensorCores
    # sharing the "parallel" batch axis).
    B = min(block_batch, max(128, _round_up(pl.cdiv(n, 2), 128)))
    num_tiles = max(pl.cdiv(n, B), 1)
    n_pad = num_tiles * B

    x3d = jnp.pad(x, (0, n_pad - n)).reshape(num_tiles, 1, B)

    # Block == full array on the last two dims -> no (8,128) divisibility hazard.
    row_spec = pl.BlockSpec((1, 1, B), lambda i: (i, 0, 0))

    def full_spec(a):
        zeros = (0,) * a.ndim
        return pl.BlockSpec(a.shape, lambda i: zeros)   # resident across the grid

    args = [x3d]
    in_specs = [row_spec]
    if is_train:
        eps3d = jnp.pad(jnp.asarray(eps, jnp.float32).reshape(-1),
                        (0, n_pad - n)).reshape(num_tiles, 1, B)
        args.append(eps3d)
        in_specs.append(row_spec)

    if hidden_layers > 0:
        names = ("w_in", "b_in", "w_h", "b_h", "w_out", "b_out")
    else:  # omit zero-sized hidden stacks entirely
        names = ("w_in", "b_in", "w_out", "b_out")
    weight_bytes = 0
    for pfx in ("enc", "dec"):
        for nm in names:
            w = params[f"{pfx}_{nm}"]
            if nm == "w_h" and hidden_matmul == "mxu_bf16":
                # Cast once in the wrapper: resident bf16 weights halve VMEM/DMA
                # and avoid a per-grid-step cast in the kernel.
                w = w.astype(jnp.bfloat16)
            args.append(w)
            in_specs.append(full_spec(w))
            weight_bytes += int(w.size) * w.dtype.itemsize

    H = params["enc_w_in"].shape[0]
    # Rough VMEM budget: double-buffered resident weights + IO blocks + a few
    # [H,B] f32 activation temporaries.
    vmem_est = (2 * weight_bytes + 2 * 3 * B * 4 + 8 * H * B * 4 + (2 << 20))
    vmem_limit = int(min(vmem_est, 128 << 20)) if vmem_est > (32 << 20) else None

    kernel = functools.partial(_autoenc_kernel,
                               hidden_layers=hidden_layers,
                               is_train=is_train,
                               hidden_matmul=hidden_matmul)

    out3d = pl.pallas_call(
        kernel,
        grid=(num_tiles,),
        in_specs=in_specs,
        out_specs=row_spec,
        out_shape=jax.ShapeDtypeStruct((num_tiles, 1, B), jnp.float32),
        compiler_params=pltpu.CompilerParams(
            dimension_semantics=("parallel",),
            vmem_limit_bytes=vmem_limit),
    )(*args)

    return out3d.reshape(-1)[:n].reshape(n, 1)


def init_params(key, hidden_size, hidden_layers):
    """PyTorch-style Linear init: U(-1/sqrt(fan_in), 1/sqrt(fan_in)).

    Storage layout chosen for the batch-on-lanes kernel:
      w_in : [H, 1]    (== torch Linear(1,H).weight)
      b_in : [H, 1]
      w_h  : [L, H, H] (torch layout [out, in])
      b_h  : [L, H, 1]
      w_out: [H, 1]    (transpose of torch Linear(H,1).weight)
      b_out: [1, 1]
    Hidden stacks are only present when hidden_layers > 0.
    """
    H, L = hidden_size, hidden_layers

    def lin(key, fan_in, fan_out):
        kw, kb = jax.random.split(key)
        bound = 1.0 / jnp.sqrt(float(fan_in))
        w = jax.random.uniform(kw, (fan_out, fan_in), jnp.float32, -bound, bound)
        b = jax.random.uniform(kb, (fan_out, 1), jnp.float32, -bound, bound)
        return w, b

    params = {}
    for name in ("enc", "dec"):
        key, k_in, k_out = jax.random.split(key, 3)
        w_in, b_in = lin(k_in, 1, H)            # [H,1], [H,1]
        w_out, b_out = lin(k_out, H, 1)         # [1,H], [1,1]
        w_hs, b_hs = [], []
        for _ in range(L):
            key, kh = jax.random.split(key)
            wh, bh = lin(kh, H, H)              # [H,H], [H,1]
            w_hs.append(wh[None])
            b_hs.append(bh[None])
        if L > 0:
            params[f"{name}_w_h"] = jnp.concatenate(w_hs, axis=0)   # [L,H,H]
            params[f"{name}_b_h"] = jnp.concatenate(b_hs, axis=0)   # [L,H,1]
        params[f"{name}_w_in"], params[f"{name}_b_in"] = w_in, b_in
        params[f"{name}_w_out"] = w_out.T                           # [H,1]
        params[f"{name}_b_out"] = b_out                             # [1,1]
    return params


def reference_forward(x, eps, params, *, hidden_layers, is_train=True,
                      hidden_matmul="dot_f32"):
    """Pure-JAX reference mirroring the PyTorch module (x: [N,1]).

    hidden_matmul: "dot_f32" (plain @), "bf16" (cast operands, f32 acc — matches
    the kernel's mxu_bf16 path) or "elementwise_f32" (exact f32 — matches the
    kernel's vpu_f32 path).
    """
    def hidden(h, w, b):
        wT = w.T
        if hidden_matmul == "bf16":
            z = jnp.dot(h.astype(jnp.bfloat16), wT.astype(jnp.bfloat16),
                        preferred_element_type=jnp.float32)
        elif hidden_matmul == "elementwise_f32":
            z = jnp.sum(h[:, :, None] * wT[None, :, :], axis=1)
        else:
            z = h @ wT
        return jnp.maximum(z + b.reshape(1, -1), 0.0)

    def mlp(h, pfx):
        # Linear(1, H) written elementwise (exactly equivalent for in_features=1)
        h = jnp.maximum(h * params[f"{pfx}_w_in"].reshape(1, -1)
                        + params[f"{pfx}_b_in"].reshape(1, -1), 0.0)
        for i in range(hidden_layers):
            h = hidden(h, params[f"{pfx}_w_h"][i], params[f"{pfx}_b_h"][i])
        # Linear(H, 1) written as multiply + reduce (equivalent for out_features=1)
        return (jnp.sum(h * params[f"{pfx}_w_out"].reshape(1, -1),
                        axis=-1, keepdims=True)
                + params[f"{pfx}_b_out"].reshape(1, 1))

    y = mlp(x, "enc")
    yhat = y + eps if is_train else jnp.round(y)
    return mlp(yhat, "dec")


if __name__ == "__main__":
    hidden_size = 32
    hidden_layers = 2
    batch = 8

    key = jax.random.PRNGKey(0)
    k_params, k_x, k_eps, k_params0 = jax.random.split(key, 4)

    params = init_params(k_params, hidden_size, hidden_layers)
    x = jax.random.normal(k_x, (batch, 1), jnp.float32)              # one scalar per row
    eps = jax.random.uniform(k_eps, (batch, 1), jnp.float32) - 0.5   # U(-0.5, 0.5)

    # --- default path: bf16 hidden matmuls on the MXU, f32 accumulate ---
    xhat_bf16_train = jax.block_until_ready(
        autoencoder_forward(x, eps, params, hidden_layers=hidden_layers, is_train=True))
    xhat_bf16_eval = jax.block_until_ready(
        autoencoder_forward(x, None, params, hidden_layers=hidden_layers, is_train=False))
    ref_bf16_train = reference_forward(x, eps, params, hidden_layers=hidden_layers,
                                       is_train=True, hidden_matmul="bf16")
    ref_bf16_eval = reference_forward(x, eps, params, hidden_layers=hidden_layers,
                                      is_train=False, hidden_matmul="bf16")
    assert jnp.allclose(xhat_bf16_train, ref_bf16_train, atol=1e-3, rtol=1e-3)
    assert jnp.allclose(xhat_bf16_eval, ref_bf16_eval, atol=1e-3, rtol=1e-3)

    # --- f32 MXU path (tight-tolerance check against the plain-f32 reference) ---
    xhat_f32_train = jax.block_until_ready(
        autoencoder_forward(x, eps, params, hidden_layers=hidden_layers,
                            is_train=True, hidden_matmul="mxu_f32"))
    xhat_f32_eval = jax.block_until_ready(
        autoencoder_forward(x, None, params, hidden_layers=hidden_layers,
                            is_train=False, hidden_matmul="mxu_f32"))
    ref_f32_train = reference_forward(x, eps, params, hidden_layers=hidden_layers,
                                      is_train=True, hidden_matmul="dot_f32")
    ref_f32_eval = reference_forward(x, eps, params, hidden_layers=hidden_layers,
                                     is_train=False, hidden_matmul="dot_f32")
    assert jnp.allclose(xhat_f32_train, ref_f32_train, atol=1e-5, rtol=1e-5)
    assert jnp.allclose(xhat_f32_eval, ref_f32_eval, atol=1e-5, rtol=1e-5)

    # --- VPU fallback path for tiny H (exact f32) ---
    xhat_vpu = jax.block_until_ready(
        autoencoder_forward(x, eps, params, hidden_layers=hidden_layers,
                            is_train=True, hidden_matmul="vpu_f32"))
    ref_vpu = reference_forward(x, eps, params, hidden_layers=hidden_layers,
                                is_train=True, hidden_matmul="elementwise_f32")
    assert jnp.allclose(xhat_vpu, ref_vpu, atol=1e-4, rtol=1e-4)

    # --- hidden_layers == 0 path (zero-sized weight stacks are omitted entirely) ---
    params0 = init_params(k_params0, hidden_size, 0)
    xhat0 = jax.block_until_ready(
        autoencoder_forward(x, eps, params0, hidden_layers=0, is_train=True))
    ref0 = reference_forward(x, eps, params0, hidden_layers=0, is_train=True)
    assert jnp.allclose(xhat0, ref0, atol=1e-5, rtol=1e-5)

    print("KERNEL_OK")
</pallas_src>

<mosaic_0001>
module attributes {stable_mosaic.version = 11 : i64} {
  func.func @_autoenc_kernel(%arg0: i32, %arg1: memref<1x1x128xf32, #tpu.memory_space<vmem>>, %arg2: memref<1x1x128xf32, #tpu.memory_space<vmem>>, %arg3: memref<32x1xf32, #tpu.memory_space<vmem>>, %arg4: memref<32x1xf32, #tpu.memory_space<vmem>>, %arg5: memref<2x32x32xbf16, #tpu.memory_space<vmem>>, %arg6: memref<2x32x1xf32, #tpu.memory_space<vmem>>, %arg7: memref<32x1xf32, #tpu.memory_space<vmem>>, %arg8: memref<1x1xf32, #tpu.memory_space<vmem>>, %arg9: memref<32x1xf32, #tpu.memory_space<vmem>>, %arg10: memref<32x1xf32, #tpu.memory_space<vmem>>, %arg11: memref<2x32x32xbf16, #tpu.memory_space<vmem>>, %arg12: memref<2x32x1xf32, #tpu.memory_space<vmem>>, %arg13: memref<32x1xf32, #tpu.memory_space<vmem>>, %arg14: memref<1x1xf32, #tpu.memory_space<vmem>>, %arg15: memref<1x1x128xf32, #tpu.memory_space<vmem>>) attributes {dimension_semantics = [#tpu.dimension_semantics<parallel>], iteration_bounds = array<i64: 1>, scalar_prefetch = 0 : i64, scratch_operands = 0 : i64, tpu.core_type = #tpu.core_type<tc>, window_params = [{transform_indices = @transform_0, window_bounds = array<i64: 1, 1, 128>}, {transform_indices = @transform_1, window_bounds = array<i64: 1, 1, 128>}, {pipeline_mode = #tpu.pipeline_mode<synchronous>, transform_indices = @transform_2, window_bounds = array<i64: 32, 1>}, {pipeline_mode = #tpu.pipeline_mode<synchronous>, transform_indices = @transform_3, window_bounds = array<i64: 32, 1>}, {pipeline_mode = #tpu.pipeline_mode<synchronous>, transform_indices = @transform_4, window_bounds = array<i64: 2, 32, 32>}, {pipeline_mode = #tpu.pipeline_mode<synchronous>, transform_indices = @transform_5, window_bounds = array<i64: 2, 32, 1>}, {pipeline_mode = #tpu.pipeline_mode<synchronous>, transform_indices = @transform_6, window_bounds = array<i64: 32, 1>}, {pipeline_mode = #tpu.pipeline_mode<synchronous>, transform_indices = @transform_7, window_bounds = array<i64: 1, 1>}, {pipeline_mode = #tpu.pipeline_mode<synchronous>, transform_indices = @transform_8, window_bounds = array<i64: 32, 1>}, {pipeline_mode = #tpu.pipeline_mode<synchronous>, transform_indices = @transform_9, window_bounds = array<i64: 32, 1>}, {pipeline_mode = #tpu.pipeline_mode<synchronous>, transform_indices = @transform_10, window_bounds = array<i64: 2, 32, 32>}, {pipeline_mode = #tpu.pipeline_mode<synchronous>, transform_indices = @transform_11, window_bounds = array<i64: 2, 32, 1>}, {pipeline_mode = #tpu.pipeline_mode<synchronous>, transform_indices = @transform_12, window_bounds = array<i64: 32, 1>}, {pipeline_mode = #tpu.pipeline_mode<synchronous>, transform_indices = @transform_13, window_bounds = array<i64: 1, 1>}, {transform_indices = @transform_14, window_bounds = array<i64: 1, 1, 128>}]} {
    %c0 = arith.constant 0 : index
    %c0_0 = arith.constant 0 : index
    %c0_1 = arith.constant 0 : index
    %0 = vector.load %arg1[%c0, %c0_0, %c0_1] : memref<1x1x128xf32, #tpu.memory_space<vmem>>, vector<1x1x128xf32>
    %1 = vector.shape_cast %0 : vector<1x1x128xf32> to vector<1x128xf32>
    %c0_2 = arith.constant 0 : index
    %c0_3 = arith.constant 0 : index
    %2 = vector.load %arg3[%c0_2, %c0_3] : memref<32x1xf32, #tpu.memory_space<vmem>>, vector<32x1xf32>
    %3 = vector.broadcast %2 : vector<32x1xf32> to vector<32x128xf32>
    %4 = vector.broadcast %1 : vector<1x128xf32> to vector<32x128xf32>
    %5 = arith.mulf %3, %4 : vector<32x128xf32>
    %c0_4 = arith.constant 0 : index
    %c0_5 = arith.constant 0 : index
    %6 = vector.load %arg4[%c0_4, %c0_5] : memref<32x1xf32, #tpu.memory_space<vmem>>, vector<32x1xf32>
    %7 = vector.broadcast %6 : vector<32x1xf32> to vector<32x128xf32>
    %8 = arith.addf %5, %7 : vector<32x128xf32>
    %cst = arith.constant 0.000000e+00 : f32
    %9 = vector.broadcast %cst : f32 to vector<32x128xf32>
    %10 = arith.maximumf %8, %9 : vector<32x128xf32>
    %c0_6 = arith.constant 0 : index
    %c0_7 = arith.constant 0 : index
    %c0_8 = arith.constant 0 : index
    %11 = vector.load %arg5[%c0_6, %c0_7, %c0_8] : memref<2x32x32xbf16, #tpu.memory_space<vmem>>, vector<1x32x32xbf16>
    %12 = vector.shape_cast %11 : vector<1x32x32xbf16> to vector<32x32xbf16>
    %c0_9 = arith.constant 0 : index
    %c0_10 = arith.constant 0 : index
    %c0_11 = arith.constant 0 : index
    %13 = vector.load %arg6[%c0_9, %c0_10, %c0_11] : memref<2x32x1xf32, #tpu.memory_space<vmem>>, vector<1x32x1xf32>
    %14 = vector.shape_cast %13 : vector<1x32x1xf32> to vector<32x1xf32>
    %15 = arith.truncf %10 : vector<32x128xf32> to vector<32x128xbf16>
    %cst_12 = arith.constant dense<0.000000e+00> : vector<32x128xf32>
    %16 = tpu.matmul %12, %15, %cst_12 {dimension_numbers = #tpu.dot_dimension_numbers<[1], [0], [0], [1], [0, 0, 1, 1], [], []>} : vector<32x32xbf16>, vector<32x128xbf16>, vector<32x128xf32> -> vector<32x128xf32>
    %17 = vector.broadcast %14 : vector<32x1xf32> to vector<32x128xf32>
    %18 = arith.addf %16, %17 : vector<32x128xf32>
    %cst_13 = arith.constant 0.000000e+00 : f32
    %19 = vector.broadcast %cst_13 : f32 to vector<32x128xf32>
    %20 = arith.maximumf %18, %19 : vector<32x128xf32>
    %c1 = arith.constant 1 : index
    %c0_14 = arith.constant 0 : index
    %c0_15 = arith.constant 0 : index
    %21 = vector.load %arg5[%c1, %c0_14, %c0_15] : memref<2x32x32xbf16, #tpu.memory_space<vmem>>, vector<1x32x32xbf16>
    %22 = vector.shape_cast %21 : vector<1x32x32xbf16> to vector<32x32xbf16>
    %c1_16 = arith.constant 1 : index
    %c0_17 = arith.constant 0 : index
    %c0_18 = arith.constant 0 : index
    %23 = vector.load %arg6[%c1_16, %c0_17, %c0_18] : memref<2x32x1xf32, #tpu.memory_space<vmem>>, vector<1x32x1xf32>
    %24 = vector.shape_cast %23 : vector<1x32x1xf32> to vector<32x1xf32>
    %25 = arith.truncf %20 : vector<32x128xf32> to vector<32x128xbf16>
    %cst_19 = arith.constant dense<0.000000e+00> : vector<32x128xf32>
    %26 = tpu.matmul %22, %25, %cst_19 {dimension_numbers = #tpu.dot_dimension_numbers<[1], [0], [0], [1], [0, 0, 1, 1], [], []>} : vector<32x32xbf16>, vector<32x128xbf16>, vector<32x128xf32> -> vector<32x128xf32>
    %27 = vector.broadcast %24 : vector<32x1xf32> to vector<32x128xf32>
    %28 = arith.addf %26, %27 : vector<32x128xf32>
    %cst_20 = arith.constant 0.000000e+00 : f32
    %29 = vector.broadcast %cst_20 : f32 to vector<32x128xf32>
    %30 = arith.maximumf %28, %29 : vector<32x128xf32>
    %c0_21 = arith.constant 0 : index
    %c0_22 = arith.constant 0 : index
    %31 = vector.load %arg7[%c0_21, %c0_22] : memref<32x1xf32, #tpu.memory_space<vmem>>, vector<32x1xf32>
    %32 = vector.broadcast %31 : vector<32x1xf32> to vector<32x128xf32>
    %33 = arith.mulf %32, %30 : vector<32x128xf32>
    %cst_23 = arith.constant dense<0.000000e+00> : vector<128xf32>
    %34 = vector.multi_reduction <add>, %33, %cst_23 [0] : vector<32x128xf32> to vector<128xf32>
    %35 = vector.shape_cast %34 : vector<128xf32> to vector<1x128xf32>
    %c0_24 = arith.constant 0 : index
    %c0_25 = arith.constant 0 : index
    %36 = vector.load %arg8[%c0_24, %c0_25] : memref<1x1xf32, #tpu.memory_space<vmem>>, vector<1x1xf32>
    %37 = vector.broadcast %36 : vector<1x1xf32> to vector<1x128xf32>
    %38 = arith.addf %35, %37 : vector<1x128xf32>
    %c0_26 = arith.constant 0 : index
    %c0_27 = arith.constant 0 : index
    %c0_28 = arith.constant 0 : index
    %39 = vector.load %arg2[%c0_26, %c0_27, %c0_28] : memref<1x1x128xf32, #tpu.memory_space<vmem>>, vector<1x1x128xf32>
    %40 = vector.shape_cast %39 : vector<1x1x128xf32> to vector<1x128xf32>
    %41 = arith.addf %38, %40 : vector<1x128xf32>
    %c0_29 = arith.constant 0 : index
    %c0_30 = arith.constant 0 : index
    %42 = vector.load %arg9[%c0_29, %c0_30] : memref<32x1xf32, #tpu.memory_space<vmem>>, vector<32x1xf32>
    %43 = vector.broadcast %42 : vector<32x1xf32> to vector<32x128xf32>
    %44 = vector.broadcast %41 : vector<1x128xf32> to vector<32x128xf32>
    %45 = arith.mulf %43, %44 : vector<32x128xf32>
    %c0_31 = arith.constant 0 : index
    %c0_32 = arith.constant 0 : index
    %46 = vector.load %arg10[%c0_31, %c0_32] : memref<32x1xf32, #tpu.memory_space<vmem>>, vector<32x1xf32>
    %47 = vector.broadcast %46 : vector<32x1xf32> to vector<32x128xf32>
    %48 = arith.addf %45, %47 : vector<32x128xf32>
    %cst_33 = arith.constant 0.000000e+00 : f32
    %49 = vector.broadcast %cst_33 : f32 to vector<32x128xf32>
    %50 = arith.maximumf %48, %49 : vector<32x128xf32>
    %c0_34 = arith.constant 0 : index
    %c0_35 = arith.constant 0 : index
    %c0_36 = arith.constant 0 : index
    %51 = vector.load %arg11[%c0_34, %c0_35, %c0_36] : memref<2x32x32xbf16, #tpu.memory_space<vmem>>, vector<1x32x32xbf16>
    %52 = vector.shape_cast %51 : vector<1x32x32xbf16> to vector<32x32xbf16>
    %c0_37 = arith.constant 0 : index
    %c0_38 = arith.constant 0 : index
    %c0_39 = arith.constant 0 : index
    %53 = vector.load %arg12[%c0_37, %c0_38, %c0_39] : memref<2x32x1xf32, #tpu.memory_space<vmem>>, vector<1x32x1xf32>
    %54 = vector.shape_cast %53 : vector<1x32x1xf32> to vector<32x1xf32>
    %55 = arith.truncf %50 : vector<32x128xf32> to vector<32x128xbf16>
    %cst_40 = arith.constant dense<0.000000e+00> : vector<32x128xf32>
    %56 = tpu.matmul %52, %55, %cst_40 {dimension_numbers = #tpu.dot_dimension_numbers<[1], [0], [0], [1], [0, 0, 1, 1], [], []>} : vector<32x32xbf16>, vector<32x128xbf16>, vector<32x128xf32> -> vector<32x128xf32>
    %57 = vector.broadcast %54 : vector<32x1xf32> to vector<32x128xf32>
    %58 = arith.addf %56, %57 : vector<32x128xf32>
    %cst_41 = arith.constant 0.000000e+00 : f32
    %59 = vector.broadcast %cst_41 : f32 to vector<32x128xf32>
    %60 = arith.maximumf %58, %59 : vector<32x128xf32>
    %c1_42 = arith.constant 1 : index
    %c0_43 = arith.constant 0 : index
    %c0_44 = arith.constant 0 : index
    %61 = vector.load %arg11[%c1_42, %c0_43, %c0_44] : memref<2x32x32xbf16, #tpu.memory_space<vmem>>, vector<1x32x32xbf16>
    %62 = vector.shape_cast %61 : vector<1x32x32xbf16> to vector<32x32xbf16>
    %c1_45 = arith.constant 1 : index
    %c0_46 = arith.constant 0 : index
    %c0_47 = arith.constant 0 : index
    %63 = vector.load %arg12[%c1_45, %c0_46, %c0_47] : memref<2x32x1xf32, #tpu.memory_space<vmem>>, vector<1x32x1xf32>
    %64 = vector.shape_cast %63 : vector<1x32x1xf32> to vector<32x1xf32>
    %65 = arith.truncf %60 : vector<32x128xf32> to vector<32x128xbf16>
    %cst_48 = arith.constant dense<0.000000e+00> : vector<32x128xf32>
    %66 = tpu.matmul %62, %65, %cst_48 {dimension_numbers = #tpu.dot_dimension_numbers<[1], [0], [0], [1], [0, 0, 1, 1], [], []>} : vector<32x32xbf16>, vector<32x128xbf16>, vector<32x128xf32> -> vector<32x128xf32>
    %67 = vector.broadcast %64 : vector<32x1xf32> to vector<32x128xf32>
    %68 = arith.addf %66, %67 : vector<32x128xf32>
    %cst_49 = arith.constant 0.000000e+00 : f32
    %69 = vector.broadcast %cst_49 : f32 to vector<32x128xf32>
    %70 = arith.maximumf %68, %69 : vector<32x128xf32>
    %c0_50 = arith.constant 0 : index
    %c0_51 = arith.constant 0 : index
    %71 = vector.load %arg13[%c0_50, %c0_51] : memref<32x1xf32, #tpu.memory_space<vmem>>, vector<32x1xf32>
    %72 = vector.broadcast %71 : vector<32x1xf32> to vector<32x128xf32>
    %73 = arith.mulf %72, %70 : vector<32x128xf32>
    %cst_52 = arith.constant dense<0.000000e+00> : vector<128xf32>
    %74 = vector.multi_reduction <add>, %73, %cst_52 [0] : vector<32x128xf32> to vector<128xf32>
    %75 = vector.shape_cast %74 : vector<128xf32> to vector<1x128xf32>
    %c0_53 = arith.constant 0 : index
    %c0_54 = arith.constant 0 : index
    %76 = vector.load %arg14[%c0_53, %c0_54] : memref<1x1xf32, #tpu.memory_space<vmem>>, vector<1x1xf32>
    %77 = vector.broadcast %76 : vector<1x1xf32> to vector<1x128xf32>
    %78 = arith.addf %75, %77 : vector<1x128xf32>
    %c0_55 = arith.constant 0 : index
    %c0_56 = arith.constant 0 : index
    %c0_57 = arith.constant 0 : index
    %79 = vector.load %arg15[%c0_55, %c0_56, %c0_57] : memref<1x1x128xf32, #tpu.memory_space<vmem>>, vector<1x1x128xf32>
    %80 = vector.shape_cast %79 : vector<1x1x128xf32> to vector<1x128xf32>
    %81 = vector.shape_cast %78 : vector<1x128xf32> to vector<1x1x128xf32>
    tpu.vector_store %arg15[%c0_55, %c0_56, %c0_57], %81 {strides = array<i32>} : memref<1x1x128xf32, #tpu.memory_space<vmem>>, vector<1x1x128xf32>,
    return
  }
  func.func @transform_0(%arg0: i32) -> (i32, i32, i32) {
    %c0_i32 = arith.constant 0 : i32
    %c0_i32_0 = arith.constant 0 : i32
    %c0_i32_1 = arith.constant 0 : i32
    return %arg0, %c0_i32, %c0_i32_0 : i32, i32, i32
  }
  func.func @transform_1(%arg0: i32) -> (i32, i32, i32) {
    %c0_i32 = arith.constant 0 : i32
    %c0_i32_0 = arith.constant 0 : i32
    %c0_i32_1 = arith.constant 0 : i32
    return %arg0, %c0_i32, %c0_i32_0 : i32, i32, i32
  }
  func.func @transform_2(%arg0: i32) -> (i32, i32) {
    %c0_i32 = arith.constant 0 : i32
    %c0_i32_0 = arith.constant 0 : i32
    %c0_i32_1 = arith.constant 0 : i32
    return %c0_i32, %c0_i32_0 : i32, i32
  }
  func.func @transform_3(%arg0: i32) -> (i32, i32) {
    %c0_i32 = arith.constant 0 : i32
    %c0_i32_0 = arith.constant 0 : i32
    %c0_i32_1 = arith.constant 0 : i32
    return %c0_i32, %c0_i32_0 : i32, i32
  }
  func.func @transform_4(%arg0: i32) -> (i32, i32, i32) {
    %c0_i32 = arith.constant 0 : i32
    %c0_i32_0 = arith.constant 0 : i32
    %c0_i32_1 = arith.constant 0 : i32
    %c0_i32_2 = arith.constant 0 : i32
    return %c0_i32, %c0_i32_0, %c0_i32_1 : i32, i32, i32
  }
  func.func @transform_5(%arg0: i32) -> (i32, i32, i32) {
    %c0_i32 = arith.constant 0 : i32
    %c0_i32_0 = arith.constant 0 : i32
    %c0_i32_1 = arith.constant 0 : i32
    %c0_i32_2 = arith.constant 0 : i32
    return %c0_i32, %c0_i32_0, %c0_i32_1 : i32, i32, i32
  }
  func.func @transform_6(%arg0: i32) -> (i32, i32) {
    %c0_i32 = arith.constant 0 : i32
    %c0_i32_0 = arith.constant 0 : i32
    %c0_i32_1 = arith.constant 0 : i32
    return %c0_i32, %c0_i32_0 : i32, i32
  }
  func.func @transform_7(%arg0: i32) -> (i32, i32) {
    %c0_i32 = arith.constant 0 : i32
    %c0_i32_0 = arith.constant 0 : i32
    %c0_i32_1 = arith.constant 0 : i32
    return %c0_i32, %c0_i32_0 : i32, i32
  }
  func.func @transform_8(%arg0: i32) -> (i32, i32) {
    %c0_i32 = arith.constant 0 : i32
    %c0_i32_0 = arith.constant 0 : i32
    %c0_i32_1 = arith.constant 0 : i32
    return %c0_i32, %c0_i32_0 : i32, i32
  }
  func.func @transform_9(%arg0: i32) -> (i32, i32) {
    %c0_i32 = arith.constant 0 : i32
    %c0_i32_0 = arith.constant 0 : i32
    %c0_i32_1 = arith.constant 0 : i32
    return %c0_i32, %c0_i32_0 : i32, i32
  }
  func.func @transform_10(%arg0: i32) -> (i32, i32, i32) {
    %c0_i32 = arith.constant 0 : i32
    %c0_i32_0 = arith.constant 0 : i32
    %c0_i32_1 = arith.constant 0 : i32
    %c0_i32_2 = arith.constant 0 : i32
    return %c0_i32, %c0_i32_0, %c0_i32_1 : i32, i32, i32
  }
  func.func @transform_11(%arg0: i32) -> (i32, i32, i32) {
    %c0_i32 = arith.constant 0 : i32
    %c0_i32_0 = arith.constant 0 : i32
    %c0_i32_1 = arith.constant 0 : i32
    %c0_i32_2 = arith.constant 0 : i32
    return %c0_i32, %c0_i32_0, %c0_i32_1 : i32, i32, i32
  }
  func.func @transform_12(%arg0: i32) -> (i32, i32) {
    %c0_i32 = arith.constant 0 : i32
    %c0_i32_0 = arith.constant 0 : i32
    %c0_i32_1 = arith.constant 0 : i32
    return %c0_i32, %c0_i32_0 : i32, i32
  }
  func.func @transform_13(%arg0: i32) -> (i32, i32) {
    %c0_i32 = arith.constant 0 : i32
    %c0_i32_0 = arith.constant 0 : i32
    %c0_i32_1 = arith.constant 0 : i32
    return %c0_i32, %c0_i32_0 : i32, i32
  }
  func.func @transform_14(%arg0: i32) -> (i32, i32, i32) {
    %c0_i32 = arith.constant 0 : i32
    %c0_i32_0 = arith.constant 0 : i32
    %c0_i32_1 = arith.constant 0 : i32
    return %arg0, %c0_i32, %c0_i32_0 : i32, i32, i32
  }
}

</mosaic_0001>

<llo_original>
// kernel: tpu_custom_call.1
$region0: #{tpu_custom_call.1}
  #allocation0 [shape = 'u32[]', space=smem, size = 0x4, offset = 0x4, fixed_abs, tag = 'smem constant byte address 0x4 - core index']
  #allocation1 [shape = 'u32[144,128]{1,0:T(1,128)}', space=vmem, size = 0x12000, scoped, tag = 'internal scratch']
  #allocation2 [shape = 'f32[1,1]{1,0:T(1,128)S(1)}', space=vmem, size = 0x200, scoped, tag = 'scoped memory for tpu_custom_call.1']
  #allocation3 [shape = 'f32[1,1]{1,0:T(1,128)S(1)}', space=vmem, size = 0x200, scoped, tag = 'scoped memory for tpu_custom_call.1']
  %s0 = inlined_call_operand.vmem [shape: f32[1,1,128], index: 0, kind: input, shape index: {}]
  %s1 = inlined_call_operand.vmem [shape: f32[1,1,128], index: 1, kind: input, shape index: {}]
  %s2 = inlined_call_operand.vmem [shape: f32[32,1], index: 2, kind: input, shape index: {}]
  %s3 = inlined_call_operand.vmem [shape: f32[32,1], index: 3, kind: input, shape index: {}]
  %s4 = inlined_call_operand.vmem [shape: bf16[2,32,32], index: 4, kind: input, shape index: {}]
  %s5 = inlined_call_operand.vmem [shape: f32[2,32,1], index: 5, kind: input, shape index: {}]
  %s6 = inlined_call_operand.vmem [shape: f32[32,1], index: 6, kind: input, shape index: {}]
  %s7 = inlined_call_operand.<no memory space> [shape: f32[1,1], index: 7, kind: input, shape index: {}]
  %s8 = inlined_call_operand.vmem [shape: f32[32,1], index: 8, kind: input, shape index: {}]
  %s9 = inlined_call_operand.vmem [shape: f32[32,1], index: 9, kind: input, shape index: {}]
  %s10 = inlined_call_operand.vmem [shape: bf16[2,32,32], index: 10, kind: input, shape index: {}]
  %s11 = inlined_call_operand.vmem [shape: f32[2,32,1], index: 11, kind: input, shape index: {}]
  %s12 = inlined_call_operand.vmem [shape: f32[32,1], index: 12, kind: input, shape index: {}]
  %s13 = inlined_call_operand.<no memory space> [shape: f32[1,1], index: 13, kind: input, shape index: {}]
  %s14 = inlined_call_operand.hbm [shape: f32[1,1,128], index: 14, kind: output, shape index: {}]
  %s15 = sld [smem:[#allocation0]]
  $region66: #{tpu_custom_call.1} parent=0
    _
  %s17 = ssub.s32 1, %s15
  %s18 = scalar_select 0, %s17, %s15
  %v19 = vstv %s7
  %20 = vst [vmem:[#allocation2] sm:$0x1] %v19
  %v21 = vstv %s13
  %22 = vst [vmem:[#allocation3] sm:$0x1] %v21
  $region1: #{tpu_custom_call.1} parent=0
    #allocation4 [shape = 'u8[512]{0}', space=vmem, size = 0x400, scoped, tag = 'output window, operand 0, single buffered']
    #allocation5 [shape = 's32[1]{0}', space=sflag, size = 0x4, scoped, tag = 'scoped memory for tpu_custom_call.1']
    %23 = vsyncpa [#allocation5], 0
    // Predicated region
    $region2: #{tpu_custom_call.1} parent=1 // pred_check
      _
    $region3: #{tpu_custom_call.1} parent=1 // pred_check_branch
      %25 = sbr.rel (0) target = $region5
    $region4: #{tpu_custom_call.1} parent=1 // pred_region
      _
    $region5: #{tpu_custom_call.1} parent=1 // pred_fallthru
      _
    // Predicated region
    $region6: #{tpu_custom_call.1} parent=1 // pred_check
      _
    $region7: #{tpu_custom_call.1} parent=1 // pred_check_branch
      %27 = sbr.rel (0) target = $region9
    $region8: #{tpu_custom_call.1} parent=1 // pred_region
      _
    $region9: #{tpu_custom_call.1} parent=1 // pred_fallthru
      _
    // Predicated region
    $region10: #{tpu_custom_call.1} parent=1 // pred_check
      _
    $region11: #{tpu_custom_call.1} parent=1 // pred_check_branch
      %29 = sbr.rel (0) target = $region13
    $region12: #{tpu_custom_call.1} parent=1 // pred_region
      _
    $region13: #{tpu_custom_call.1} parent=1 // pred_fallthru
      _
    // Predicated region
    $region14: #{tpu_custom_call.1} parent=1 // pred_check
      _
    $region15: #{tpu_custom_call.1} parent=1 // pred_check_branch
      %31 = sbr.rel (0) target = $region17
    $region16: #{tpu_custom_call.1} parent=1 // pred_region
      _
    $region17: #{tpu_custom_call.1} parent=1 // pred_fallthru
      _
    // Predicated region
    $region18: #{tpu_custom_call.1} parent=1 // pred_check
      _
    $region19: #{tpu_custom_call.1} parent=1 // pred_check_branch
      %33 = sbr.rel (0) target = $region21
    $region20: #{tpu_custom_call.1} parent=1 // pred_region
      _
    $region21: #{tpu_custom_call.1} parent=1 // pred_fallthru
      _
    // Predicated region
    $region22: #{tpu_custom_call.1} parent=1 // pred_check
      _
    $region23: #{tpu_custom_call.1} parent=1 // pred_check_branch
      %35 = sbr.rel (0) target = $region25
    $region24: #{tpu_custom_call.1} parent=1 // pred_region
      _
    $region25: #{tpu_custom_call.1} parent=1 // pred_fallthru
      _
    // Predicated region
    $region26: #{tpu_custom_call.1} parent=1 // pred_check
      _
    $region27: #{tpu_custom_call.1} parent=1 // pred_check_branch
      %37 = sbr.rel (0) target = $region29
    $region28: #{tpu_custom_call.1} parent=1 // pred_region
      _
    $region29: #{tpu_custom_call.1} parent=1 // pred_fallthru
      _
    // Predicated region
    $region30: #{tpu_custom_call.1} parent=1 // pred_check
      _
    $region31: #{tpu_custom_call.1} parent=1 // pred_check_branch
      %39 = sbr.rel (0) target = $region33
    $region32: #{tpu_custom_call.1} parent=1 // pred_region
      _
    $region33: #{tpu_custom_call.1} parent=1 // pred_fallthru
      _
    // Predicated region
    $region34: #{tpu_custom_call.1} parent=1 // pred_check
      _
    $region35: #{tpu_custom_call.1} parent=1 // pred_check_branch
      %41 = sbr.rel (0) target = $region37
    $region36: #{tpu_custom_call.1} parent=1 // pred_region
      _
    $region37: #{tpu_custom_call.1} parent=1 // pred_fallthru
      _
    // Predicated region
    $region38: #{tpu_custom_call.1} parent=1 // pred_check
      _
    $region39: #{tpu_custom_call.1} parent=1 // pred_check_branch
      %43 = sbr.rel (0) target = $region41
    $region40: #{tpu_custom_call.1} parent=1 // pred_region
      _
    $region41: #{tpu_custom_call.1} parent=1 // pred_fallthru
      _
    // Predicated region
    $region42: #{tpu_custom_call.1} parent=1 // pred_check
      _
    $region43: #{tpu_custom_call.1} parent=1 // pred_check_branch
      %45 = sbr.rel (0) target = $region45
    $region44: #{tpu_custom_call.1} parent=1 // pred_region
      _
    $region45: #{tpu_custom_call.1} parent=1 // pred_fallthru
      _
    // Predicated region
    $region46: #{tpu_custom_call.1} parent=1 // pred_check
      _
    $region47: #{tpu_custom_call.1} parent=1 // pred_check_branch
      %47 = sbr.rel (0) target = $region49
    $region48: #{tpu_custom_call.1} parent=1 // pred_region
      _
    $region49: #{tpu_custom_call.1} parent=1 // pred_fallthru
      _
    // Predicated region
    $region50: #{tpu_custom_call.1} parent=1 // pred_check
      _
    $region51: #{tpu_custom_call.1} parent=1 // pred_check_branch
      %49 = sbr.rel (0) target = $region53
    $region52: #{tpu_custom_call.1} parent=1 // pred_region
      _
    $region53: #{tpu_custom_call.1} parent=1 // pred_fallthru
      _
    // Predicated region
    $region54: #{tpu_custom_call.1} parent=1 // pred_check
      _
    $region55: #{tpu_custom_call.1} parent=1 // pred_check_branch
      %51 = sbr.rel (0) target = $region57
    $region56: #{tpu_custom_call.1} parent=1 // pred_region
      _
    $region57: #{tpu_custom_call.1} parent=1 // pred_fallthru
      _
    %v53 = vld [vmem:[%s0] sm:$0x1]
    %v54 = vld [vmem:[%s2] sm:$0xff]
    %v55 = vld [vmem:[%s2 + $0x8] sm:$0xff]
    %v56 = vld [vmem:[%s2 + $0x10] sm:$0xff]
    %v57 = vld [vmem:[%s2 + $0x18] sm:$0xff]
    %59 = vset.pattern.permute.xlu0 0
    %60 = vperm.xlu0 %59, %v54
    %v61 = vpop.permute.xlu0 %60
    %64 = vset.pattern.permute.xlu0 0
    %65 = vperm.xlu0 %64, %v55
    %v66 = vpop.permute.xlu0 %65
    %69 = vset.pattern.permute.xlu0 0
    %70 = vperm.xlu0 %69, %v56
    %v71 = vpop.permute.xlu0 %70
    %74 = vset.pattern.permute.xlu0 0
    %75 = vperm.xlu0 %74, %v57
    %v76 = vpop.permute.xlu0 %75
    %v79 = vlaneseq
    %v80 = vshrl.u32 %v79, 7
    %v81 = vsub.s32 0, %v80
    %v82 = vrot.slane %v53, %v81
    %v84 = vmul.f32 %v61, %v82
    %v85 = vmul.f32 %v66, %v82
    %v86 = vmul.f32 %v71, %v82
    %v87 = vmul.f32 %v76, %v82
    %v88 = vld [vmem:[%s3] sm:$0xff]
    %v89 = vld [vmem:[%s3 + $0x8] sm:$0xff]
    %v90 = vld [vmem:[%s3 + $0x10] sm:$0xff]
    %v91 = vld [vmem:[%s3 + $0x18] sm:$0xff]
    %93 = vset.pattern.permute.xlu0 0
    %94 = vperm.xlu0 %93, %v88
    %v95 = vpop.permute.xlu0 %94
    %98 = vset.pattern.permute.xlu0 0
    %99 = vperm.xlu0 %98, %v89
    %v100 = vpop.permute.xlu0 %99
    %103 = vset.pattern.permute.xlu0 0
    %104 = vperm.xlu0 %103, %v90
    %v105 = vpop.permute.xlu0 %104
    %108 = vset.pattern.permute.xlu0 0
    %109 = vperm.xlu0 %108, %v91
    %v110 = vpop.permute.xlu0 %109
    %v112 = vadd.f32 %v84, %v95
    %v113 = vadd.f32 %v85, %v100
    %v114 = vadd.f32 %v86, %v105
    %v115 = vadd.f32 %v87, %v110
    %v116 = vmax.f32 %v112, 0.0
    %v117 = vmax.f32 %v113, 0.0
    %v118 = vmax.f32 %v114, 0.0
    %v119 = vmax.f32 %v115, 0.0
    %v120 = vld [vmem:[%s4] sm:$0xf]
    %v121 = vld [vmem:[%s4 + $0x4] sm:$0xf]
    %v122 = vld [vmem:[%s4 + $0x8] sm:$0xf]
    %v123 = vld [vmem:[%s4 + $0xc] sm:$0xf]
    %v124 = vld [vmem:[%s5] sm:$0xff]
    %v125 = vld [vmem:[%s5 + $0x8] sm:$0xff]
    %v126 = vld [vmem:[%s5 + $0x10] sm:$0xff]
    %v127 = vld [vmem:[%s5 + $0x18] sm:$0xff]
    %v128 = vpack.c.bf16 %v117, %v116
    %v129 = vpack.c.bf16 %v119, %v118
    %131 = vset.pattern.permute.xlu0 0
    %132 = vperm.xlu0 %131, %v124
    %v133 = vpop.permute.xlu0 %132
    %136 = vset.pattern.permute.xlu0 0
    %137 = vperm.xlu0 %136, %v125
    %v138 = vpop.permute.xlu0 %137
    %141 = vset.pattern.permute.xlu0 0
    %142 = vperm.xlu0 %141, %v126
    %v143 = vpop.permute.xlu0 %142
    %146 = vset.pattern.permute.xlu0 0
    %147 = vperm.xlu0 %146, %v127
    %v148 = vpop.permute.xlu0 %147
    %v154 = vunpack.c.l.b16 %v120
    %v155 = vunpack.c.l.b16 %v121
    %v156 = vunpack.c.l.b16 %v122
    %v157 = vunpack.c.l.b16 %v123
    %v158 = vpack.c.b16 %v155, %v154
    %v159 = vpack.c.b16 %v157, %v156
    %vm160 = vcmask 261120
    %v162 = vsel %vm160, %v158, 0
    %v165 = vsel %vm160, %v159, 0
    %167 = vmatprep.subr.bf16.mxu0 0
    %168 = vmatpush1.bf16.msra.mxu0 %v128
    %169 = vmatprep.subr.bf16.mxu0 0
    %170 = vmatpush1.bf16.msra.mxu0 %v129
    %171 = vmatprep.subr.bf16.mxu0 0
    %172 = vmatpush1.bf16.msra.mxu0 0
    %173 = vmatprep.subr.bf16.mxu0 0
    %174 = vmatpush1.bf16.msra.mxu0 0
    %175 = vmatprep.subr.bf16.mxu0 0
    %176 = vmatpush1.bf16.msra.mxu0 0
    %177 = vmatprep.subr.bf16.mxu0 0
    %178 = vmatpush1.bf16.msra.mxu0 0
    %179 = vmatprep.subr.bf16.mxu0 0
    %180 = vmatpush1.bf16.msra.mxu0 0
    %181 = vmatprep.subr.bf16.mxu0 0
    %182 = vmatpush1.bf16.msra.mxu0 0
    %183 = vmatprep.subr.bf16.mxu0 0
    %184 = vmatpush1.bf16.msra.mxu0 0
    %185 = vmatprep.subr.bf16.mxu0 0
    %186 = vmatpush1.bf16.msra.mxu0 0
    %187 = vmatprep.subr.bf16.mxu0 0
    %188 = vmatpush1.bf16.msra.mxu0 0
    %189 = vmatprep.subr.bf16.mxu0 0
    %190 = vmatpush1.bf16.msra.mxu0 0
    %191 = vmatprep.subr.bf16.mxu0 0
    %192 = vmatpush1.bf16.msra.mxu0 0
    %193 = vmatprep.subr.bf16.mxu0 0
    %194 = vmatpush1.bf16.msra.mxu0 0
    %195 = vmatprep.subr.bf16.mxu0 0
    %196 = vmatpush1.bf16.msra.mxu0 0
    %197 = vmatprep.subr.bf16.mxu0 0
    %198 = vmatpush1.bf16.msra.mxu0 0
    %199 = vmatprep.mubr.bf16.mxu0 0
    %200 = vmatmul.mubr.bf16.gmra.mrb[0].mxu0 %v162
    %v201 = vpop.f32.mrb[0].mxu0
    %v202 = vadd.f32 %v133, %v201
    %v203 = vpop.f32.mrb[0].mxu0
    %v204 = vpop.f32.mrb[0].mxu0
    %v205 = vadd.f32 %v138, %v204
    %v206 = vpop.f32.mrb[0].mxu0
    %207 = vmatprep.mubr.bf16.mxu0 0
    %208 = vmatmul.mubr.bf16.gmra.mrb[0].mxu0 %v165
    %v209 = vpop.f32.mrb[0].mxu0
    %v210 = vadd.f32 %v143, %v209
    %v211 = vpop.f32.mrb[0].mxu0
    %v212 = vpop.f32.mrb[0].mxu0
    %v213 = vadd.f32 %v148, %v212
    %v214 = vpop.f32.mrb[0].mxu0
    %215 = vdwg.mxu0
    %v216 = vmax.f32 %v202, 0.0
    %v217 = vmax.f32 %v205, 0.0
    %v218 = vmax.f32 %v210, 0.0
    %v219 = vmax.f32 %v213, 0.0
    %s220 = scalar_lea.vmem %s4, 16
    %v221 = vld [vmem:[%s220] sm:$0xf]
    %v222 = vld [vmem:[%s220 + $0x4] sm:$0xf]
    %v223 = vld [vmem:[%s220 + $0x8] sm:$0xf]
    %v224 = vld [vmem:[%s220 + $0xc] sm:$0xf]
    %s225 = scalar_lea.vmem %s5, 32
    %v226 = vld [vmem:[%s225] sm:$0xff]
    %v227 = vld [vmem:[%s225 + $0x8] sm:$0xff]
    %v228 = vld [vmem:[%s225 + $0x10] sm:$0xff]
    %v229 = vld [vmem:[%s225 + $0x18] sm:$0xff]
    %v230 = vpack.c.bf16 %v217, %v216
    %v231 = vpack.c.bf16 %v219, %v218
    %233 = vset.pattern.permute.xlu0 0
    %234 = vperm.xlu0 %233, %v226
    %v235 = vpop.permute.xlu0 %234
    %238 = vset.pattern.permute.xlu0 0
    %239 = vperm.xlu0 %238, %v227
    %v240 = vpop.permute.xlu0 %239
    %243 = vset.pattern.permute.xlu0 0
    %244 = vperm.xlu0 %243, %v228
    %v245 = vpop.permute.xlu0 %244
    %248 = vset.pattern.permute.xlu0 0
    %249 = vperm.xlu0 %248, %v229
    %v250 = vpop.permute.xlu0 %249
    %v256 = vunpack.c.l.b16 %v221
    %v257 = vunpack.c.l.b16 %v222
    %v258 = vunpack.c.l.b16 %v223
    %v259 = vunpack.c.l.b16 %v224
    %v260 = vpack.c.b16 %v257, %v256
    %v261 = vpack.c.b16 %v259, %v258
    %v263 = vsel %vm160, %v260, 0
    %v266 = vsel %vm160, %v261, 0
    %268 = vmatprep.subr.bf16.mxu0 0
    %269 = vmatpush1.bf16.msra.mxu0 %v230
    %270 = vmatprep.subr.bf16.mxu0 0
    %271 = vmatpush1.bf16.msra.mxu0 %v231
    %272 = vmatprep.subr.bf16.mxu0 0
    %273 = vmatpush1.bf16.msra.mxu0 0
    %274 = vmatprep.subr.bf16.mxu0 0
    %275 = vmatpush1.bf16.msra.mxu0 0
    %276 = vmatprep.subr.bf16.mxu0 0
    %277 = vmatpush1.bf16.msra.mxu0 0
    %278 = vmatprep.subr.bf16.mxu0 0
    %279 = vmatpush1.bf16.msra.mxu0 0
    %280 = vmatprep.subr.bf16.mxu0 0
    %281 = vmatpush1.bf16.msra.mxu0 0
    %282 = vmatprep.subr.bf16.mxu0 0
    %283 = vmatpush1.bf16.msra.mxu0 0
    %284 = vmatprep.subr.bf16.mxu0 0
    %285 = vmatpush1.bf16.msra.mxu0 0
    %286 = vmatprep.subr.bf16.mxu0 0
    %287 = vmatpush1.bf16.msra.mxu0 0
    %288 = vmatprep.subr.bf16.mxu0 0
    %289 = vmatpush1.bf16.msra.mxu0 0
    %290 = vmatprep.subr.bf16.mxu0 0
    %291 = vmatpush1.bf16.msra.mxu0 0
    %292 = vmatprep.subr.bf16.mxu0 0
    %293 = vmatpush1.bf16.msra.mxu0 0
    %294 = vmatprep.subr.bf16.mxu0 0
    %295 = vmatpush1.bf16.msra.mxu0 0
    %296 = vmatprep.subr.bf16.mxu0 0
    %297 = vmatpush1.bf16.msra.mxu0 0
    %298 = vmatprep.subr.bf16.mxu0 0
    %299 = vmatpush1.bf16.msra.mxu0 0
    %300 = vmatprep.mubr.bf16.mxu0 0
    %301 = vmatmul.mubr.bf16.gmra.mrb[0].mxu0 %v263
    %v302 = vpop.f32.mrb[0].mxu0
    %v303 = vadd.f32 %v235, %v302
    %v304 = vpop.f32.mrb[0].mxu0
    %v305 = vpop.f32.mrb[0].mxu0
    %v306 = vadd.f32 %v240, %v305
    %v307 = vpop.f32.mrb[0].mxu0
    %308 = vmatprep.mubr.bf16.mxu0 0
    %309 = vmatmul.mubr.bf16.gmra.mrb[0].mxu0 %v266
    %v310 = vpop.f32.mrb[0].mxu0
    %v311 = vadd.f32 %v245, %v310
    %v312 = vpop.f32.mrb[0].mxu0
    %v313 = vpop.f32.mrb[0].mxu0
    %v314 = vadd.f32 %v250, %v313
    %v315 = vpop.f32.mrb[0].mxu0
    %316 = vdwg.mxu0
    %v317 = vmax.f32 %v303, 0.0
    %v318 = vmax.f32 %v306, 0.0
    %v319 = vmax.f32 %v311, 0.0
    %v320 = vmax.f32 %v314, 0.0
    %v321 = vld [vmem:[%s6] sm:$0xff]
    %v322 = vld [vmem:[%s6 + $0x8] sm:$0xff]
    %v323 = vld [vmem:[%s6 + $0x10] sm:$0xff]
    %v324 = vld [vmem:[%s6 + $0x18] sm:$0xff]
    %326 = vset.pattern.permute.xlu0 0
    %327 = vperm.xlu0 %326, %v321
    %v328 = vpop.permute.xlu0 %327
    %331 = vset.pattern.permute.xlu0 0
    %332 = vperm.xlu0 %331, %v322
    %v333 = vpop.permute.xlu0 %332
    %336 = vset.pattern.permute.xlu0 0
    %337 = vperm.xlu0 %336, %v323
    %v338 = vpop.permute.xlu0 %337
    %341 = vset.pattern.permute.xlu0 0
    %342 = vperm.xlu0 %341, %v324
    %v343 = vpop.permute.xlu0 %342
    %v345 = vmul.f32 %v328, %v317
    %v346 = vmul.f32 %v333, %v318
    %v347 = vmul.f32 %v338, %v319
    %v348 = vmul.f32 %v343, %v320
    %v349 = vadd.f32 %v345, %v346
    %v350 = vadd.f32 %v349, %v347
    %v351 = vadd.f32 %v350, %v348
    %v352 = vrot.slane %v351, 4
    %v353 = vadd.f32 %v351, %v352
    %v354 = vrot.slane %v353, 2
    %v355 = vadd.f32 %v353, %v354
    %v356 = vrot.slane %v355, 1
    %v357 = vadd.f32 %v355, %v356
    %v358 = vld [vmem:[#allocation2] sm:$0x1]
    %360 = vset.pattern.permute.xlu0 0
    %361 = vperm.xlu0 %360, %v358
    %v362 = vpop.permute.xlu0 %361
    %v364 = vlaneseq
    %v365 = vshrl.u32 %v364, 7
    %v366 = vsub.s32 0, %v365
    %v367 = vrot.slane %v362, %v366
    %v368 = vadd.f32 %v357, %v367
    %v369 = vld [vmem:[%s1] sm:$0x1]
    %v370 = vadd.f32 %v368, %v369
    %v371 = vld [vmem:[%s8] sm:$0xff]
    %v372 = vld [vmem:[%s8 + $0x8] sm:$0xff]
    %v373 = vld [vmem:[%s8 + $0x10] sm:$0xff]
    %v374 = vld [vmem:[%s8 + $0x18] sm:$0xff]
    %376 = vset.pattern.permute.xlu0 0
    %377 = vperm.xlu0 %376, %v371
    %v378 = vpop.permute.xlu0 %377
    %381 = vset.pattern.permute.xlu0 0
    %382 = vperm.xlu0 %381, %v372
    %v383 = vpop.permute.xlu0 %382
    %386 = vset.pattern.permute.xlu0 0
    %387 = vperm.xlu0 %386, %v373
    %v388 = vpop.permute.xlu0 %387
    %391 = vset.pattern.permute.xlu0 0
    %392 = vperm.xlu0 %391, %v374
    %v393 = vpop.permute.xlu0 %392
    %v395 = vlaneseq
    %v396 = vshrl.u32 %v395, 7
    %v397 = vsub.s32 0, %v396
    %v398 = vrot.slane %v370, %v397
    %v399 = vmul.f32 %v378, %v398
    %v400 = vmul.f32 %v383, %v398
    %v401 = vmul.f32 %v388, %v398
    %v402 = vmul.f32 %v393, %v398
    %v403 = vld [vmem:[%s9] sm:$0xff]
    %v404 = vld [vmem:[%s9 + $0x8] sm:$0xff]
    %v405 = vld [vmem:[%s9 + $0x10] sm:$0xff]
    %v406 = vld [vmem:[%s9 + $0x18] sm:$0xff]
    %408 = vset.pattern.permute.xlu0 0
    %409 = vperm.xlu0 %408, %v403
    %v410 = vpop.permute.xlu0 %409
    %413 = vset.pattern.permute.xlu0 0
    %414 = vperm.xlu0 %413, %v404
    %v415 = vpop.permute.xlu0 %414
    %418 = vset.pattern.permute.xlu0 0
    %419 = vperm.xlu0 %418, %v405
    %v420 = vpop.permute.xlu0 %419
    %423 = vset.pattern.permute.xlu0 0
    %424 = vperm.xlu0 %423, %v406
    %v425 = vpop.permute.xlu0 %424
    %v427 = vadd.f32 %v399, %v410
    %v428 = vadd.f32 %v400, %v415
    %v429 = vadd.f32 %v401, %v420
    %v430 = vadd.f32 %v402, %v425
    %v431 = vmax.f32 %v427, 0.0
    %v432 = vmax.f32 %v428, 0.0
    %v433 = vmax.f32 %v429, 0.0
    %v434 = vmax.f32 %v430, 0.0
    %v435 = vld [vmem:[%s10] sm:$0xf]
    %v436 = vld [vmem:[%s10 + $0x4] sm:$0xf]
    %v437 = vld [vmem:[%s10 + $0x8] sm:$0xf]
    %v438 = vld [vmem:[%s10 + $0xc] sm:$0xf]
    %v439 = vld [vmem:[%s11] sm:$0xff]
    %v440 = vld [vmem:[%s11 + $0x8] sm:$0xff]
    %v441 = vld [vmem:[%s11 + $0x10] sm:$0xff]
    %v442 = vld [vmem:[%s11 + $0x18] sm:$0xff]
    %v443 = vpack.c.bf16 %v432, %v431
    %v444 = vpack.c.bf16 %v434, %v433
    %446 = vset.pattern.permute.xlu0 0
    %447 = vperm.xlu0 %446, %v439
    %v448 = vpop.permute.xlu0 %447
    %451 = vset.pattern.permute.xlu0 0
    %452 = vperm.xlu0 %451, %v440
    %v453 = vpop.permute.xlu0 %452
    %456 = vset.pattern.permute.xlu0 0
    %457 = vperm.xlu0 %456, %v441
    %v458 = vpop.permute.xlu0 %457
    %461 = vset.pattern.permute.xlu0 0
    %462 = vperm.xlu0 %461, %v442
    %v463 = vpop.permute.xlu0 %462
    %v469 = vunpack.c.l.b16 %v435
    %v470 = vunpack.c.l.b16 %v436
    %v471 = vunpack.c.l.b16 %v437
    %v472 = vunpack.c.l.b16 %v438
    %v473 = vpack.c.b16 %v470, %v469
    %v474 = vpack.c.b16 %v472, %v471
    %v476 = vsel %vm160, %v473, 0
    %v479 = vsel %vm160, %v474, 0
    %481 = vmatprep.subr.bf16.mxu0 0
    %482 = vmatpush1.bf16.msra.mxu0 %v443
    %483 = vmatprep.subr.bf16.mxu0 0
    %484 = vmatpush1.bf16.msra.mxu0 %v444
    %485 = vmatprep.subr.bf16.mxu0 0
    %486 = vmatpush1.bf16.msra.mxu0 0
    %487 = vmatprep.subr.bf16.mxu0 0
    %488 = vmatpush1.bf16.msra.mxu0 0
    %489 = vmatprep.subr.bf16.mxu0 0
    %490 = vmatpush1.bf16.msra.mxu0 0
    %491 = vmatprep.subr.bf16.mxu0 0
    %492 = vmatpush1.bf16.msra.mxu0 0
    %493 = vmatprep.subr.bf16.mxu0 0
    %494 = vmatpush1.bf16.msra.mxu0 0
    %495 = vmatprep.subr.bf16.mxu0 0
    %496 = vmatpush1.bf16.msra.mxu0 0
    %497 = vmatprep.subr.bf16.mxu0 0
    %498 = vmatpush1.bf16.msra.mxu0 0
    %499 = vmatprep.subr.bf16.mxu0 0
    %500 = vmatpush1.bf16.msra.mxu0 0
    %501 = vmatprep.subr.bf16.mxu0 0
    %502 = vmatpush1.bf16.msra.mxu0 0
    %503 = vmatprep.subr.bf16.mxu0 0
    %504 = vmatpush1.bf16.msra.mxu0 0
    %505 = vmatprep.subr.bf16.mxu0 0
    %506 = vmatpush1.bf16.msra.mxu0 0
    %507 = vmatprep.subr.bf16.mxu0 0
    %508 = vmatpush1.bf16.msra.mxu0 0
    %509 = vmatprep.subr.bf16.mxu0 0
    %510 = vmatpush1.bf16.msra.mxu0 0
    %511 = vmatprep.subr.bf16.mxu0 0
    %512 = vmatpush1.bf16.msra.mxu0 0
    %513 = vmatprep.mubr.bf16.mxu0 0
    %514 = vmatmul.mubr.bf16.gmra.mrb[0].mxu0 %v476
    %v515 = vpop.f32.mrb[0].mxu0
    %v516 = vadd.f32 %v448, %v515
    %v517 = vpop.f32.mrb[0].mxu0
    %v518 = vpop.f32.mrb[0].mxu0
    %v519 = vadd.f32 %v453, %v518
    %v520 = vpop.f32.mrb[0].mxu0
    %521 = vmatprep.mubr.bf16.mxu0 0
    %522 = vmatmul.mubr.bf16.gmra.mrb[0].mxu0 %v479
    %v523 = vpop.f32.mrb[0].mxu0
    %v524 = vadd.f32 %v458, %v523
    %v525 = vpop.f32.mrb[0].mxu0
    %v526 = vpop.f32.mrb[0].mxu0
    %v527 = vadd.f32 %v463, %v526
    %v528 = vpop.f32.mrb[0].mxu0
    %529 = vdwg.mxu0
    %v530 = vmax.f32 %v516, 0.0
    %v531 = vmax.f32 %v519, 0.0
    %v532 = vmax.f32 %v524, 0.0
    %v533 = vmax.f32 %v527, 0.0
    %s534 = scalar_lea.vmem %s10, 16
    %v535 = vld [vmem:[%s534] sm:$0xf]
    %v536 = vld [vmem:[%s534 + $0x4] sm:$0xf]
    %v537 = vld [vmem:[%s534 + $0x8] sm:$0xf]
    %v538 = vld [vmem:[%s534 + $0xc] sm:$0xf]
    %s539 = scalar_lea.vmem %s11, 32
    %v540 = vld [vmem:[%s539] sm:$0xff]
    %v541 = vld [vmem:[%s539 + $0x8] sm:$0xff]
    %v542 = vld [vmem:[%s539 + $0x10] sm:$0xff]
    %v543 = vld [vmem:[%s539 + $0x18] sm:$0xff]
    %v544 = vpack.c.bf16 %v531, %v530
    %v545 = vpack.c.bf16 %v533, %v532
    %547 = vset.pattern.permute.xlu0 0
    %548 = vperm.xlu0 %547, %v540
    %v549 = vpop.permute.xlu0 %548
    %552 = vset.pattern.permute.xlu0 0
    %553 = vperm.xlu0 %552, %v541
    %v554 = vpop.permute.xlu0 %553
    %557 = vset.pattern.permute.xlu0 0
    %558 = vperm.xlu0 %557, %v542
    %v559 = vpop.permute.xlu0 %558
    %562 = vset.pattern.permute.xlu0 0
    %563 = vperm.xlu0 %562, %v543
    %v564 = vpop.permute.xlu0 %563
    %v570 = vunpack.c.l.b16 %v535
    %v571 = vunpack.c.l.b16 %v536
    %v572 = vunpack.c.l.b16 %v537
    %v573 = vunpack.c.l.b16 %v538
    %v574 = vpack.c.b16 %v571, %v570
    %v575 = vpack.c.b16 %v573, %v572
    %v577 = vsel %vm160, %v574, 0
    %v580 = vsel %vm160, %v575, 0
    %582 = vmatprep.subr.bf16.mxu0 0
    %583 = vmatpush1.bf16.msra.mxu0 %v544
    %584 = vmatprep.subr.bf16.mxu0 0
    %585 = vmatpush1.bf16.msra.mxu0 %v545
    %586 = vmatprep.subr.bf16.mxu0 0
    %587 = vmatpush1.bf16.msra.mxu0 0
    %588 = vmatprep.subr.bf16.mxu0 0
    %589 = vmatpush1.bf16.msra.mxu0 0
    %590 = vmatprep.subr.bf16.mxu0 0
    %591 = vmatpush1.bf16.msra.mxu0 0
    %592 = vmatprep.subr.bf16.mxu0 0
    %593 = vmatpush1.bf16.msra.mxu0 0
    %594 = vmatprep.subr.bf16.mxu0 0
    %595 = vmatpush1.bf16.msra.mxu0 0
    %596 = vmatprep.subr.bf16.mxu0 0
    %597 = vmatpush1.bf16.msra.mxu0 0
    %598 = vmatprep.subr.bf16.mxu0 0
    %599 = vmatpush1.bf16.msra.mxu0 0
    %600 = vmatprep.subr.bf16.mxu0 0
    %601 = vmatpush1.bf16.msra.mxu0 0
    %602 = vmatprep.subr.bf16.mxu0 0
    %603 = vmatpush1.bf16.msra.mxu0 0
    %604 = vmatprep.subr.bf16.mxu0 0
    %605 = vmatpush1.bf16.msra.mxu0 0
    %606 = vmatprep.subr.bf16.mxu0 0
    %607 = vmatpush1.bf16.msra.mxu0 0
    %608 = vmatprep.subr.bf16.mxu0 0
    %609 = vmatpush1.bf16.msra.mxu0 0
    %610 = vmatprep.subr.bf16.mxu0 0
    %611 = vmatpush1.bf16.msra.mxu0 0
    %612 = vmatprep.subr.bf16.mxu0 0
    %613 = vmatpush1.bf16.msra.mxu0 0
    %614 = vmatprep.mubr.bf16.mxu0 0
    %615 = vmatmul.mubr.bf16.gmra.mrb[0].mxu0 %v577
    %v616 = vpop.f32.mrb[0].mxu0
    %v617 = vadd.f32 %v549, %v616
    %v618 = vpop.f32.mrb[0].mxu0
    %v619 = vpop.f32.mrb[0].mxu0
    %v620 = vadd.f32 %v554, %v619
    %v621 = vpop.f32.mrb[0].mxu0
    %622 = vmatprep.mubr.bf16.mxu0 0
    %623 = vmatmul.mubr.bf16.gmra.mrb[0].mxu0 %v580
    %v624 = vpop.f32.mrb[0].mxu0
    %v625 = vadd.f32 %v559, %v624
    %v626 = vpop.f32.mrb[0].mxu0
    %v627 = vpop.f32.mrb[0].mxu0
    %v628 = vadd.f32 %v564, %v627
    %v629 = vpop.f32.mrb[0].mxu0
    %630 = vdwg.mxu0
    %v631 = vmax.f32 %v617, 0.0
    %v632 = vmax.f32 %v620, 0.0
    %v633 = vmax.f32 %v625, 0.0
    %v634 = vmax.f32 %v628, 0.0
    %v635 = vld [vmem:[%s12] sm:$0xff]
    %v636 = vld [vmem:[%s12 + $0x8] sm:$0xff]
    %v637 = vld [vmem:[%s12 + $0x10] sm:$0xff]
    %v638 = vld [vmem:[%s12 + $0x18] sm:$0xff]
    %640 = vset.pattern.permute.xlu0 0
    %641 = vperm.xlu0 %640, %v635
    %v642 = vpop.permute.xlu0 %641
    %645 = vset.pattern.permute.xlu0 0
    %646 = vperm.xlu0 %645, %v636
    %v647 = vpop.permute.xlu0 %646
    %650 = vset.pattern.permute.xlu0 0
    %651 = vperm.xlu0 %650, %v637
    %v652 = vpop.permute.xlu0 %651
    %655 = vset.pattern.permute.xlu0 0
    %656 = vperm.xlu0 %655, %v638
    %v657 = vpop.permute.xlu0 %656
    %v659 = vmul.f32 %v642, %v631
    %v660 = vmul.f32 %v647, %v632
    %v661 = vmul.f32 %v652, %v633
    %v662 = vmul.f32 %v657, %v634
    %v663 = vadd.f32 %v659, %v660
    %v664 = vadd.f32 %v663, %v661
    %v665 = vadd.f32 %v664, %v662
    %v666 = vrot.slane %v665, 4
    %v667 = vadd.f32 %v665, %v666
    %v668 = vrot.slane %v667, 2
    %v669 = vadd.f32 %v667, %v668
    %v670 = vrot.slane %v669, 1
    %v671 = vadd.f32 %v669, %v670
    %v672 = vld [vmem:[#allocation3] sm:$0x1]
    %674 = vset.pattern.permute.xlu0 0
    %675 = vperm.xlu0 %674, %v672
    %v676 = vpop.permute.xlu0 %675
    %v678 = vlaneseq
    %v679 = vshrl.u32 %v678, 7
    %v680 = vsub.s32 0, %v679
    %v681 = vrot.slane %v676, %v680
    %v682 = vadd.f32 %v671, %v681
    %683 = vst [vmem:[#allocation4] sm:$0x1] %v682
    // Predicated region
    $region58: #{tpu_custom_call.1} parent=1 // pred_check
      _
    $region59: #{tpu_custom_call.1} parent=1 // pred_check_branch
      %685 = sbr.rel (0) target = $region61
    $region60: #{tpu_custom_call.1} parent=1 // pred_region
      %s687 = ssub.s32 16, 16
      %688 = vsyncadd [#allocation5], %s687
      %s690 = sshll.u32 [#allocation4], 4
      %s691 = int_to_ptr.vmem [resolvable:$true] %s690
      %693 = dma.vmem_to_hbm [thread:$0]  %s691, 16, %s14, [#allocation5]
    $region61: #{tpu_custom_call.1} parent=1 // pred_fallthru
      _
    // Predicated region
    $region62: #{tpu_custom_call.1} parent=1 // pred_check
      _
    $region63: #{tpu_custom_call.1} parent=1 // pred_check_branch
      %695 = sbr.rel (0) target = $region65
    $region64: #{tpu_custom_call.1} parent=1 // pred_region
      %696 = dma.done [#allocation5], 16
    $region65: #{tpu_custom_call.1} parent=1 // pred_fallthru
      _
    %697 = vsyncpa [#allocation5], 1

</llo_original>
